<compile_context>
chip_gen: v6e
topology: v6e:2x2x1
jax: 0.10.0
libtpu: 0.0.40
codegen_flags: <defaults>
</compile_context>

<pallas_src>
import functools

import jax
import jax.numpy as jnp
from jax.experimental import pallas as pl
from jax.experimental.pallas import tpu as pltpu


def _round_up(x, m):
    return (x + m - 1) // m * m


# ----------------------------------------------------------------------------
# Pallas kernel: grouped matmul + bias + training-mode BatchNorm + activation.
# Grid is (Np // tn,); every step sees all G groups and all M rows, so the BN
# reduction and normalization complete in a single pass for its channel tile.
# ----------------------------------------------------------------------------
def _fused_layer_kernel(a_ref, w_ref, b_ref, gam_ref, bet_ref, o_ref, *,
                        groups, use_bn, act, neg_slope, m_true, eps):
    bias = b_ref[...]                                      # (1, tn) f32
    accs = [
        jnp.dot(a_ref[g], w_ref[g], preferred_element_type=jnp.float32) + bias
        for g in range(groups)
    ]                                                      # each (Mp, tn) f32

    if use_bn:
        mp, tn = accs[0].shape
        valid = jax.lax.broadcasted_iota(jnp.int32, (mp, tn), 0) < m_true
        inv_cnt = 1.0 / float(groups * m_true)
        s1 = jnp.zeros((1, tn), jnp.float32)
        for acc in accs:
            s1 = s1 + jnp.sum(jnp.where(valid, acc, 0.0), axis=0,
                              keepdims=True)
        mean = s1 * inv_cnt
        s2 = jnp.zeros((1, tn), jnp.float32)
        for acc in accs:                                   # centered variance
            d = acc - mean
            s2 = s2 + jnp.sum(jnp.where(valid, d * d, 0.0), axis=0,
                              keepdims=True)
        var = s2 * inv_cnt
        scale = gam_ref[...] * jax.lax.rsqrt(var + eps)
        shift = bet_ref[...] - mean * scale
        accs = [acc * scale + shift for acc in accs]

    for g in range(groups):
        z = accs[g]
        if act == "leaky":
            z = jnp.where(z >= 0, z, neg_slope * z)
        elif act == "relu":
            z = jnp.maximum(z, 0.0)
        elif act == "tanh":
            z = jnp.tanh(z)
        o_ref[g] = z.astype(o_ref.dtype)


def fused_matmul_bn_act(a_g, w_g, bias, gamma, beta, *, use_bn, act,
                        neg_slope=0.2, eps=1e-5):
    """act(BN(A_g @ W_g + bias)) for all groups g in a single pallas_call.

    a_g : (G, M, K) patches, w_g : (G, K, N) weights, bias/gamma/beta : (N,).
    BN (if enabled) reduces over all groups and the true M rows.
    Returns (G, M, N) bf16.
    """
    G, M, K = a_g.shape
    G2, K2, N = w_g.shape
    assert G == G2 and K == K2
    Kp = _round_up(K, 128)
    Np = _round_up(N, 128)
    Mp = _round_up(M, 16)          # bf16 sublane granule only - no 128 padding
    tn = 128                       # v5e-native MXU width, lane-dense stores

    a_p = jnp.pad(a_g.astype(jnp.bfloat16), ((0, 0), (0, Mp - M), (0, Kp - K)))
    w_p = jnp.pad(w_g.astype(jnp.bfloat16), ((0, 0), (0, Kp - K), (0, Np - N)))
    b_p = jnp.pad(bias.astype(jnp.float32), (0, Np - N)).reshape(1, Np)
    g_p = jnp.pad(gamma.astype(jnp.float32), (0, Np - N)).reshape(1, Np)
    be_p = jnp.pad(beta.astype(jnp.float32), (0, Np - N)).reshape(1, Np)

    y = pl.pallas_call(
        functools.partial(_fused_layer_kernel, groups=G, use_bn=use_bn,
                          act=act, neg_slope=neg_slope, m_true=M, eps=eps),
        out_shape=jax.ShapeDtypeStruct((G, Mp, Np), jnp.bfloat16),
        grid=(Np // tn,),
        in_specs=[
            pl.BlockSpec((G, Mp, Kp), lambda j: (0, 0, 0)),   # A stays resident
            pl.BlockSpec((G, Kp, tn), lambda j: (0, 0, j)),   # W pipelined in N
            pl.BlockSpec((1, tn), lambda j: (0, j)),
            pl.BlockSpec((1, tn), lambda j: (0, j)),
            pl.BlockSpec((1, tn), lambda j: (0, j)),
        ],
        out_specs=pl.BlockSpec((G, Mp, tn), lambda j: (0, 0, j)),
        compiler_params=pltpu.CompilerParams(
            dimension_semantics=("parallel",)),
    )(a_p, w_p, b_p, g_p, be_p)
    return y[:, :M, :N]


# ----------------------------------------------------------------------------
# im2col glue (XLA) + layer wrappers (one pallas_call per layer).
# ----------------------------------------------------------------------------
def _extract_patches(x_nhwc, k, stride):
    """(N,H,W,C) -> ((N*Ho*Wo), k*k*C); K-index order = (kh, kw, c)."""
    N, H, W, C = x_nhwc.shape
    Ho = (H - k) // stride + 1
    Wo = (W - k) // stride + 1
    cols = []
    for kh in range(k):
        for kw in range(k):
            patch = jax.lax.slice(
                x_nhwc,
                (0, kh, kw, 0),
                (N, kh + (Ho - 1) * stride + 1, kw + (Wo - 1) * stride + 1, C),
                (1, stride, stride, 1))
            cols.append(patch)
    patches = jnp.stack(cols, axis=3)              # (N, Ho, Wo, k*k, C)
    return patches.reshape(N * Ho * Wo, k * k * C), Ho, Wo


def _bn_params(bn, cout):
    if bn is not None:
        return bn[0], bn[1], True
    return jnp.ones((cout,), jnp.float32), jnp.zeros((cout,), jnp.float32), False


def conv2d_layer(x_nhwc, w_oihw, b, bn, act):
    """PyTorch Conv2d(Cin,Cout,4,2,1) [+ BatchNorm2d] + activation."""
    N = x_nhwc.shape[0]
    Cout = w_oihw.shape[0]
    xp = jnp.pad(x_nhwc, ((0, 0), (1, 1), (1, 1), (0, 0)))
    patches, Ho, Wo = _extract_patches(xp, 4, 2)
    w_mat = jnp.transpose(w_oihw, (2, 3, 1, 0)).reshape(-1, Cout)
    gamma, beta, use_bn = _bn_params(bn, Cout)
    y = fused_matmul_bn_act(patches[None], w_mat[None], b, gamma, beta,
                            use_bn=use_bn, act=act)
    return y[0].reshape(N, Ho, Wo, Cout)


def conv_transpose2d_layer(x_nhwc, w_iohw, b, bn, act):
    """PyTorch ConvTranspose2d(Cin,Cout,4,2,1) [+ BatchNorm2d] + activation.

    Sub-pixel decomposition: output rows/cols (2p+a, 2q+c) equal a 2x2
    stride-1 conv of the asymmetrically padded input with the kernel slice
    flip(w)[:, :, a::2, c::2]; the four parities run as one grouped kernel
    (leading G=4 axis) so the whole layer is a single pallas_call.
    """
    N, Hi, Wi, Cin = x_nhwc.shape
    Cout = w_iohw.shape[1]
    w_flip = jnp.flip(w_iohw, axis=(2, 3))          # (Cin, Cout, 4, 4)
    a_list, w_list = [], []
    for a in (0, 1):
        for c in (0, 1):
            ph = (1, 0) if a == 0 else (0, 1)
            pw = (1, 0) if c == 0 else (0, 1)
            xp = jnp.pad(x_nhwc, ((0, 0), ph, pw, (0, 0)))
            patches, _, _ = _extract_patches(xp, 2, 1)
            a_list.append(patches)                  # (N*Hi*Wi, 4*Cin)
            w_sub = w_flip[:, :, a::2, c::2]        # (Cin, Cout, 2, 2)
            w_list.append(
                jnp.transpose(w_sub, (2, 3, 0, 1)).reshape(4 * Cin, Cout))
    a_g = jnp.stack(a_list, axis=0)                 # (4, N*Hi*Wi, 4*Cin)
    w_g = jnp.stack(w_list, axis=0)                 # (4, 4*Cin, Cout)
    gamma, beta, use_bn = _bn_params(bn, Cout)
    y = fused_matmul_bn_act(a_g, w_g, b, gamma, beta,
                            use_bn=use_bn, act=act)  # (4, N*Hi*Wi, Cout)
    y = y.reshape(2, 2, N, Hi, Wi, Cout)             # (a, c, N, Hi, Wi, Cout)
    y = jnp.transpose(y, (2, 3, 0, 4, 1, 5))         # (N, Hi, a, Wi, c, Cout)
    return y.reshape(N, 2 * Hi, 2 * Wi, Cout)


# ----------------------------------------------------------------------------
# Model: parameters + forward.
# ----------------------------------------------------------------------------
ENC_CH = [(3, 64), (64, 128), (128, 256), (256, 512)]
DEC_CH = [(512, 256), (256, 128), (128, 64), (64, 3)]


def init_params(key):
    params = {"enc": [], "dec": []}
    for (cin, cout) in ENC_CH:
        key, k1 = jax.random.split(key)
        params["enc"].append({
            "w": 0.05 * jax.random.normal(k1, (cout, cin, 4, 4), jnp.float32),
            "b": jnp.zeros((cout,), jnp.float32),
            "gamma": jnp.ones((cout,), jnp.float32),
            "beta": jnp.zeros((cout,), jnp.float32)})
    for (cin, cout) in DEC_CH:
        key, k1 = jax.random.split(key)
        params["dec"].append({
            "w": 0.05 * jax.random.normal(k1, (cin, cout, 4, 4), jnp.float32),
            "b": jnp.zeros((cout,), jnp.float32),
            "gamma": jnp.ones((cout,), jnp.float32),
            "beta": jnp.zeros((cout,), jnp.float32)})
    return params


def simple_generator_forward(params, x_nchw):
    """Forward matching SimpleGenerator.forward (training-mode BatchNorm)."""
    x = jnp.transpose(x_nchw, (0, 2, 3, 1)).astype(jnp.float32)  # NCHW -> NHWC

    # Encoder: Conv + LeakyReLU(0.2), then 3x (Conv + BN + LeakyReLU(0.2)).
    p = params["enc"][0]
    x = conv2d_layer(x, p["w"], p["b"], bn=None, act="leaky")
    for i in range(1, 4):
        p = params["enc"][i]
        x = conv2d_layer(x, p["w"], p["b"], bn=(p["gamma"], p["beta"]),
                         act="leaky")

    # Decoder: 3x (ConvT + BN + ReLU), then ConvT + Tanh.
    for i in range(3):
        p = params["dec"][i]
        x = conv_transpose2d_layer(x, p["w"], p["b"],
                                   bn=(p["gamma"], p["beta"]), act="relu")
    p = params["dec"][3]
    x = conv_transpose2d_layer(x, p["w"], p["b"], bn=None, act="tanh")

    return jnp.transpose(x, (0, 3, 1, 2)).astype(jnp.float32)    # NHWC -> NCHW


if __name__ == "__main__":
    key = jax.random.PRNGKey(0)
    key, kx = jax.random.split(key)
    # NCHW input: batch=2, 3 channels, 16x16 spatial (16 / 2^4 = 1 bottleneck).
    x = jax.random.normal(kx, (2, 3, 16, 16), jnp.float32)
    params = init_params(key)

    # --- numerical spot-check of the conv / conv-transpose kernels (no BN,
    # no activation, zero bias) against lax.conv_general_dilated on the same
    # bf16-rounded operands (addresses the tap/parity-indexing concern). -----
    def _conv_ref(xn, w_oihw):
        w_hwio = jnp.transpose(w_oihw, (2, 3, 1, 0))
        return jax.lax.conv_general_dilated(
            xn, w_hwio, (2, 2), ((1, 1), (1, 1)),
            dimension_numbers=("NHWC", "HWIO", "NHWC"),
            precision=jax.lax.Precision.HIGHEST)

    def _convt_ref(xn, w_iohw):
        w_hwio = jnp.transpose(jnp.flip(w_iohw, (2, 3)), (2, 3, 0, 1))
        return jax.lax.conv_general_dilated(
            xn, w_hwio, (1, 1), ((2, 2), (2, 2)), lhs_dilation=(2, 2),
            dimension_numbers=("NHWC", "HWIO", "NHWC"),
            precision=jax.lax.Precision.HIGHEST)

    xt = jax.random.normal(jax.random.PRNGKey(1), (2, 4, 4, 8), jnp.float32)
    wc = 0.1 * jax.random.normal(jax.random.PRNGKey(2), (16, 8, 4, 4), jnp.float32)
    wt = 0.1 * jax.random.normal(jax.random.PRNGKey(3), (8, 16, 4, 4), jnp.float32)
    xb = xt.astype(jnp.bfloat16).astype(jnp.float32)
    wcb = wc.astype(jnp.bfloat16).astype(jnp.float32)
    wtb = wt.astype(jnp.bfloat16).astype(jnp.float32)
    zb = jnp.zeros((16,), jnp.float32)
    got_c = conv2d_layer(xt, wc, zb, bn=None, act="none").astype(jnp.float32)
    got_t = conv_transpose2d_layer(xt, wt, zb, bn=None, act="none").astype(jnp.float32)
    assert bool(jnp.allclose(got_c, _conv_ref(xb, wcb), atol=5e-2, rtol=5e-2))
    assert bool(jnp.allclose(got_t, _convt_ref(xb, wtb), atol=5e-2, rtol=5e-2))

    # --- full forward pass -------------------------------------------------
    fwd = jax.jit(simple_generator_forward)
    out = jax.block_until_ready(fwd(params, x))
    assert out.shape == (2, 3, 16, 16), out.shape
    assert bool(jnp.all(jnp.isfinite(out)))
    print("KERNEL_OK")
</pallas_src>

<mosaic_0001>
module attributes {stable_mosaic.version = 11 : i64} {
  func.func @_fused_layer_kernel(%arg0: i32, %arg1: memref<1x16x128xbf16, #tpu.memory_space<vmem>>, %arg2: memref<1x128x128xbf16, #tpu.memory_space<vmem>>, %arg3: memref<1x128xf32, #tpu.memory_space<vmem>>, %arg4: memref<1x128xf32, #tpu.memory_space<vmem>>, %arg5: memref<1x128xf32, #tpu.memory_space<vmem>>, %arg6: memref<1x16x128xbf16, #tpu.memory_space<vmem>>) attributes {dimension_semantics = [#tpu.dimension_semantics<parallel>], iteration_bounds = array<i64: 1>, scalar_prefetch = 0 : i64, scratch_operands = 0 : i64, tpu.core_type = #tpu.core_type<tc>, window_params = [{pipeline_mode = #tpu.pipeline_mode<synchronous>, transform_indices = @transform_0, window_bounds = array<i64: 1, 16, 128>}, {transform_indices = @transform_1, window_bounds = array<i64: 1, 128, 128>}, {transform_indices = @transform_2, window_bounds = array<i64: 1, 128>}, {transform_indices = @transform_3, window_bounds = array<i64: 1, 128>}, {transform_indices = @transform_4, window_bounds = array<i64: 1, 128>}, {transform_indices = @transform_5, window_bounds = array<i64: 1, 16, 128>}]} {
    %c0 = arith.constant 0 : index
    %c0_0 = arith.constant 0 : index
    %0 = vector.load %arg3[%c0, %c0_0] : memref<1x128xf32, #tpu.memory_space<vmem>>, vector<1x128xf32>
    %c0_1 = arith.constant 0 : index
    %c0_2 = arith.constant 0 : index
    %c0_3 = arith.constant 0 : index
    %1 = vector.load %arg1[%c0_1, %c0_2, %c0_3] : memref<1x16x128xbf16, #tpu.memory_space<vmem>>, vector<1x16x128xbf16>
    %2 = vector.shape_cast %1 : vector<1x16x128xbf16> to vector<16x128xbf16>
    %c0_4 = arith.constant 0 : index
    %c0_5 = arith.constant 0 : index
    %c0_6 = arith.constant 0 : index
    %3 = vector.load %arg2[%c0_4, %c0_5, %c0_6] : memref<1x128x128xbf16, #tpu.memory_space<vmem>>, vector<1x128x128xbf16>
    %4 = vector.shape_cast %3 : vector<1x128x128xbf16> to vector<128x128xbf16>
    %cst = arith.constant dense<0.000000e+00> : vector<16x128xf32>
    %5 = tpu.matmul %2, %4, %cst {dimension_numbers = #tpu.dot_dimension_numbers<[1], [0], [0], [1], [0, 0, 1, 1], [], []>} : vector<16x128xbf16>, vector<128x128xbf16>, vector<16x128xf32> -> vector<16x128xf32>
    %6 = vector.broadcast %0 : vector<1x128xf32> to vector<16x128xf32>
    %7 = arith.addf %5, %6 : vector<16x128xf32>
    %8 = arith.truncf %7 : vector<16x128xf32> to vector<16x128xbf16>
    %c0_7 = arith.constant 0 : index
    %c0_8 = arith.constant 0 : index
    %c0_9 = arith.constant 0 : index
    %9 = vector.load %arg6[%c0_7, %c0_8, %c0_9] : memref<1x16x128xbf16, #tpu.memory_space<vmem>>, vector<1x16x128xbf16>
    %10 = vector.shape_cast %9 : vector<1x16x128xbf16> to vector<16x128xbf16>
    %11 = vector.shape_cast %8 : vector<16x128xbf16> to vector<1x16x128xbf16>
    tpu.vector_store %arg6[%c0_7, %c0_8, %c0_9], %11 {strides = array<i32>} : memref<1x16x128xbf16, #tpu.memory_space<vmem>>, vector<1x16x128xbf16>,
    return
  }
  func.func @transform_0(%arg0: i32) -> (i32, i32, i32) {
    %c0_i32 = arith.constant 0 : i32
    %c0_i32_0 = arith.constant 0 : i32
    %c0_i32_1 = arith.constant 0 : i32
    %c0_i32_2 = arith.constant 0 : i32
    return %c0_i32, %c0_i32_0, %c0_i32_1 : i32, i32, i32
  }
  func.func @transform_1(%arg0: i32) -> (i32, i32, i32) {
    %c0_i32 = arith.constant 0 : i32
    %c0_i32_0 = arith.constant 0 : i32
    %c0_i32_1 = arith.constant 0 : i32
    return %c0_i32, %c0_i32_0, %arg0 : i32, i32, i32
  }
  func.func @transform_2(%arg0: i32) -> (i32, i32) {
    %c0_i32 = arith.constant 0 : i32
    %c0_i32_0 = arith.constant 0 : i32
    return %c0_i32, %arg0 : i32, i32
  }
  func.func @transform_3(%arg0: i32) -> (i32, i32) {
    %c0_i32 = arith.constant 0 : i32
    %c0_i32_0 = arith.constant 0 : i32
    return %c0_i32, %arg0 : i32, i32
  }
  func.func @transform_4(%arg0: i32) -> (i32, i32) {
    %c0_i32 = arith.constant 0 : i32
    %c0_i32_0 = arith.constant 0 : i32
    return %c0_i32, %arg0 : i32, i32
  }
  func.func @transform_5(%arg0: i32) -> (i32, i32, i32) {
    %c0_i32 = arith.constant 0 : i32
    %c0_i32_0 = arith.constant 0 : i32
    %c0_i32_1 = arith.constant 0 : i32
    return %c0_i32, %c0_i32_0, %arg0 : i32, i32, i32
  }
}

</mosaic_0001>

<llo_original>
// kernel: tpu_custom_call.1
$region0: #{tpu_custom_call.1}
  #allocation0 [shape = 'u32[]', space=smem, size = 0x4, offset = 0x4, fixed_abs, tag = 'smem constant byte address 0x4 - core index']
  #allocation1 [shape = 'u32[144,128]{1,0:T(1,128)}', space=vmem, size = 0x12000, scoped, tag = 'internal scratch']
  %s0 = inlined_call_operand.hbm [shape: bf16[1,16,128], index: 0, kind: input, shape index: {}]
  %s1 = inlined_call_operand.hbm [shape: bf16[1,128,128], index: 1, kind: input, shape index: {}]
  %s2 = inlined_call_operand.vmem [shape: f32[1,128], index: 2, kind: input, shape index: {}]
  %s3 = inlined_call_operand.vmem [shape: f32[1,128], index: 3, kind: input, shape index: {}]
  %s4 = inlined_call_operand.vmem [shape: f32[1,128], index: 4, kind: input, shape index: {}]
  %s5 = inlined_call_operand.hbm [shape: bf16[1,16,128], index: 5, kind: output, shape index: {}]
  %s6 = sld [smem:[#allocation0]]
  $region38: #{tpu_custom_call.1} parent=0
    _
  %s8 = ssub.s32 1, %s6
  %s9 = scalar_select 0, %s8, %s6
  $region1: #{tpu_custom_call.1} parent=0
    #allocation2 [shape = 'u8[4096]{0}', space=vmem, size = 0x1000, scoped, tag = 'input window, operand 0, single buffered']
    #allocation3 [shape = 's32[1]{0}', space=sflag, size = 0x4, scoped, tag = 'scoped memory for tpu_custom_call.1']
    #allocation4 [shape = 's32[1]{0}', space=sflag, size = 0x4, scoped, tag = 'scoped memory for tpu_custom_call.1']
    #allocation5 [shape = 'u8[32768]{0}', space=vmem, size = 0x8000, scoped, tag = 'input window, operand 1, single buffered']
    #allocation6 [shape = 's32[1]{0}', space=sflag, size = 0x4, scoped, tag = 'scoped memory for tpu_custom_call.1']
    #allocation7 [shape = 'u8[4096]{0}', space=vmem, size = 0x1000, scoped, tag = 'output window, operand 0, single buffered']
    %10 = vsyncpa [#allocation3], 0
    %11 = vsyncpa [#allocation6], 0
    %12 = vsyncpa [#allocation4], 0
    // Predicated region
    $region2: #{tpu_custom_call.1} parent=1 // pred_check
      _
    $region3: #{tpu_custom_call.1} parent=1 // pred_check_branch
      %14 = sbr.rel (0) target = $region5
    $region4: #{tpu_custom_call.1} parent=1 // pred_region
      %s16 = ssub.s32 128, 128
      %17 = vsyncadd [#allocation3], %s16
      %s18 = sshll.u32 [#allocation2], 4
      %s19 = int_to_ptr.vmem [resolvable:$true] %s18
      %24 = dma.hbm_to_vmem [thread:$0]  %s0, 128, %s19, [#allocation3], 64, 64, 4
    $region5: #{tpu_custom_call.1} parent=1 // pred_fallthru
      _
    // Predicated region
    $region6: #{tpu_custom_call.1} parent=1 // pred_check
      _
    $region7: #{tpu_custom_call.1} parent=1 // pred_check_branch
      %26 = sbr.rel (0) target = $region9
    $region8: #{tpu_custom_call.1} parent=1 // pred_region
      %s28 = ssub.s32 1024, 1024
      %29 = vsyncadd [#allocation6], %s28
      %s30 = sshll.u32 [#allocation5], 4
      %s31 = int_to_ptr.vmem [resolvable:$true] %s30
      %36 = dma.hbm_to_vmem [thread:$0]  %s1, 1024, %s31, [#allocation6], 64, 64, 4
    $region9: #{tpu_custom_call.1} parent=1 // pred_fallthru
      _
    // Predicated region
    $region10: #{tpu_custom_call.1} parent=1 // pred_check
      _
    $region11: #{tpu_custom_call.1} parent=1 // pred_check_branch
      %38 = sbr.rel (0) target = $region13
    $region12: #{tpu_custom_call.1} parent=1 // pred_region
      _
    $region13: #{tpu_custom_call.1} parent=1 // pred_fallthru
      _
    // Predicated region
    $region14: #{tpu_custom_call.1} parent=1 // pred_check
      _
    $region15: #{tpu_custom_call.1} parent=1 // pred_check_branch
      %40 = sbr.rel (0) target = $region17
    $region16: #{tpu_custom_call.1} parent=1 // pred_region
      _
    $region17: #{tpu_custom_call.1} parent=1 // pred_fallthru
      _
    // Predicated region
    $region18: #{tpu_custom_call.1} parent=1 // pred_check
      _
    $region19: #{tpu_custom_call.1} parent=1 // pred_check_branch
      %42 = sbr.rel (0) target = $region21
    $region20: #{tpu_custom_call.1} parent=1 // pred_region
      _
    $region21: #{tpu_custom_call.1} parent=1 // pred_fallthru
      _
    // Predicated region
    $region22: #{tpu_custom_call.1} parent=1 // pred_check
      _
    $region23: #{tpu_custom_call.1} parent=1 // pred_check_branch
      %44 = sbr.rel (0) target = $region25
    $region24: #{tpu_custom_call.1} parent=1 // pred_region
      %45 = dma.done [#allocation3], 128
    $region25: #{tpu_custom_call.1} parent=1 // pred_fallthru
      _
    // Predicated region
    $region26: #{tpu_custom_call.1} parent=1 // pred_check
      _
    $region27: #{tpu_custom_call.1} parent=1 // pred_check_branch
      %47 = sbr.rel (0) target = $region29
    $region28: #{tpu_custom_call.1} parent=1 // pred_region
      %48 = dma.done [#allocation6], 1024
    $region29: #{tpu_custom_call.1} parent=1 // pred_fallthru
      _
    %v50 = vld [vmem:[%s2] sm:$0x1]
    %v51 = vld [vmem:[#allocation2] sm:$0xf]
    %v52 = vld [vmem:[#allocation2 + $0x4] sm:$0xf]
    %v53 = vld [vmem:[#allocation5] sm:$0xf]
    %v54 = vld [vmem:[#allocation5 + $0x4] sm:$0xf]
    %v55 = vld [vmem:[#allocation5 + $0x8] sm:$0xf]
    %v56 = vld [vmem:[#allocation5 + $0xc] sm:$0xf]
    %v57 = vld [vmem:[#allocation5 + $0x10] sm:$0xf]
    %v58 = vld [vmem:[#allocation5 + $0x14] sm:$0xf]
    %v59 = vld [vmem:[#allocation5 + $0x18] sm:$0xf]
    %v60 = vld [vmem:[#allocation5 + $0x1c] sm:$0xf]
    %v61 = vld [vmem:[#allocation5 + $0x20] sm:$0xf]
    %v62 = vld [vmem:[#allocation5 + $0x24] sm:$0xf]
    %v63 = vld [vmem:[#allocation5 + $0x28] sm:$0xf]
    %v64 = vld [vmem:[#allocation5 + $0x2c] sm:$0xf]
    %v65 = vld [vmem:[#allocation5 + $0x30] sm:$0xf]
    %v66 = vld [vmem:[#allocation5 + $0x34] sm:$0xf]
    %v67 = vld [vmem:[#allocation5 + $0x38] sm:$0xf]
    %v68 = vld [vmem:[#allocation5 + $0x3c] sm:$0xf]
    %v70 = vlaneseq
    %v71 = vshrl.u32 %v70, 7
    %v72 = vsub.s32 0, %v71
    %v73 = vrot.slane %v50, %v72
    %v77 = vunpack.c.l.b16 %v51
    %v78 = vunpack.c.l.b16 %v52
    %v79 = vpack.c.b16 %v78, %v77
    %v97 = vunpack.c.l.b16 %v53
    %v98 = vunpack.c.l.b16 %v54
    %v99 = vunpack.c.l.b16 %v55
    %v100 = vunpack.c.l.b16 %v56
    %v101 = vunpack.c.l.b16 %v57
    %v102 = vunpack.c.l.b16 %v58
    %v103 = vunpack.c.l.b16 %v59
    %v104 = vunpack.c.l.b16 %v60
    %v105 = vunpack.c.l.b16 %v61
    %v106 = vunpack.c.l.b16 %v62
    %v107 = vunpack.c.l.b16 %v63
    %v108 = vunpack.c.l.b16 %v64
    %v109 = vunpack.c.l.b16 %v65
    %v110 = vunpack.c.l.b16 %v66
    %v111 = vunpack.c.l.b16 %v67
    %v112 = vunpack.c.l.b16 %v68
    %v113 = vpack.c.b16 %v98, %v97
    %v114 = vpack.c.b16 %v100, %v99
    %v115 = vpack.c.b16 %v102, %v101
    %v116 = vpack.c.b16 %v104, %v103
    %v117 = vpack.c.b16 %v106, %v105
    %v118 = vpack.c.b16 %v108, %v107
    %v119 = vpack.c.b16 %v110, %v109
    %v120 = vpack.c.b16 %v112, %v111
    %129 = vmatprep.subr.bf16.mxu0 0
    %130 = vmatpush1.bf16.msra.mxu0 %v120
    %131 = vmatprep.subr.bf16.mxu0 0
    %132 = vmatpush1.bf16.msra.mxu0 %v119
    %133 = vmatprep.subr.bf16.mxu0 0
    %134 = vmatpush1.bf16.msra.mxu0 %v118
    %135 = vmatprep.subr.bf16.mxu0 0
    %136 = vmatpush1.bf16.msra.mxu0 %v117
    %137 = vmatprep.subr.bf16.mxu0 0
    %138 = vmatpush1.bf16.msra.mxu0 %v116
    %139 = vmatprep.subr.bf16.mxu0 0
    %140 = vmatpush1.bf16.msra.mxu0 %v115
    %141 = vmatprep.subr.bf16.mxu0 0
    %142 = vmatpush1.bf16.msra.mxu0 %v114
    %143 = vmatprep.subr.bf16.mxu0 0
    %144 = vmatpush1.bf16.msra.mxu0 %v113
    %145 = vmatprep.subr.bf16.mxu0 0
    %146 = vmatpush2.bf16.msra.mxu0 0
    %147 = vmatprep.subr.bf16.mxu0 0
    %148 = vmatpush2.bf16.msra.mxu0 0
    %149 = vmatprep.subr.bf16.mxu0 0
    %150 = vmatpush2.bf16.msra.mxu0 0
    %151 = vmatprep.subr.bf16.mxu0 0
    %152 = vmatpush2.bf16.msra.mxu0 0
    %153 = vmatprep.subr.bf16.mxu0 0
    %154 = vmatpush2.bf16.msra.mxu0 0
    %155 = vmatprep.subr.bf16.mxu0 0
    %156 = vmatpush2.bf16.msra.mxu0 0
    %157 = vmatprep.subr.bf16.mxu0 0
    %158 = vmatpush2.bf16.msra.mxu0 0
    %159 = vmatprep.subr.bf16.mxu0 0
    %160 = vmatpush2.bf16.msra.mxu0 0
    %161 = vmatprep.mubr.bf16.mxu0 0
    %162 = vmatmul.mubr.bf16.gmra.mxu0 %v79
    %v163 = vpop.f32.mrf.mxu0
    %v164 = vadd.f32 %v73, %v163
    %v165 = vpop.f32.mrf.mxu0
    %v166 = vpop.f32.mrf.mxu0
    %v167 = vadd.f32 %v73, %v166
    %v168 = vpop.f32.mrf.mxu0
    %169 = vdwg.mxu0
    %v170 = vpack.c.bf16 %v167, %v164
    %v172 = vunpack.c.l.b16 %v170
    %v173 = vunpack.c.h.b16 %v170
    %v174 = vpack.c.b16 %v172, %v172
    %v175 = vpack.c.b16 %v173, %v173
    %178 = vst [vmem:[#allocation7] sm:$0xf] %v174
    %179 = vst [vmem:[#allocation7 + $0x4] sm:$0xf] %v175
    // Predicated region
    $region30: #{tpu_custom_call.1} parent=1 // pred_check
      _
    $region31: #{tpu_custom_call.1} parent=1 // pred_check_branch
      %181 = sbr.rel (0) target = $region33
    $region32: #{tpu_custom_call.1} parent=1 // pred_region
      %s183 = ssub.s32 128, 128
      %184 = vsyncadd [#allocation4], %s183
      %s185 = sshll.u32 [#allocation7], 4
      %s186 = int_to_ptr.vmem [resolvable:$true] %s185
      %191 = dma.vmem_to_hbm [thread:$0]  %s186, 128, %s5, [#allocation4], 64, 64, 4
    $region33: #{tpu_custom_call.1} parent=1 // pred_fallthru
      _
    // Predicated region
    $region34: #{tpu_custom_call.1} parent=1 // pred_check
      _
    $region35: #{tpu_custom_call.1} parent=1 // pred_check_branch
      %193 = sbr.rel (0) target = $region37
    $region36: #{tpu_custom_call.1} parent=1 // pred_region
      %194 = dma.done [#allocation4], 128
    $region37: #{tpu_custom_call.1} parent=1 // pred_fallthru
      _
    %195 = vsyncpa [#allocation3], 1
    %196 = vsyncpa [#allocation6], 1
    %197 = vsyncpa [#allocation4], 1

</llo_original>
